<compile_context>
chip_gen: v7x
topology: tpu7x:2x2x1
jax: 0.10.0
libtpu: 0.0.40
codegen_flags: <defaults>
</compile_context>

<pallas_src>
import jax
import jax.numpy as jnp
import numpy as np
from jax.experimental import pallas as pl
from jax.experimental.pallas import tpu as pltpu


# ----------------------------------------------------------------------------
# Kernels
# ----------------------------------------------------------------------------
def _light_forward_kernel(light_ref, out_ref):
    # forward(): return self.light  (pure scalar pass-through in SMEM)
    out_ref[0, 0] = light_ref[0, 0]


def _offset_kernel(idx_ref, table_ref, out_ref):
    # offset property: nn.Embedding(num_embeddings=1, dim=3) lookup.
    # table_ref is the embedding weight padded to one (8, 128) VMEM tile;
    # out_ref is a lane-dense (1, 128) row, sliced to (1, 3) by the wrapper.
    i = idx_ref[0]
    out_ref[...] = table_ref[pl.ds(i, 1), :]


# ----------------------------------------------------------------------------
# Wrappers
# ----------------------------------------------------------------------------
@jax.jit
def point_light_forward(light):
    """Pallas implementation of PointLightNetwork.forward()."""
    light2d = jnp.reshape(jnp.asarray(light, jnp.float32), (1, 1))
    out = pl.pallas_call(
        _light_forward_kernel,
        out_shape=jax.ShapeDtypeStruct((1, 1), jnp.float32),
        in_specs=[pl.BlockSpec(memory_space=pltpu.MemorySpace.SMEM)],
        out_specs=pl.BlockSpec(memory_space=pltpu.MemorySpace.SMEM),
    )(light2d)
    return out[0, 0]


@jax.jit
def embedding_lookup(table, idx):
    """Pallas implementation of self.light_offset(LongTensor([0]))."""
    num, dim = table.shape  # (1, 3)
    # Pad the tiny embedding table into a single (8, 128) tile; padded
    # rows/lanes are zero so the gathered row is exact.
    table_pad = (
        jnp.zeros((8, 128), jnp.float32).at[:num, :dim].set(table.astype(jnp.float32))
    )
    idx = idx.astype(jnp.int32)
    out = pl.pallas_call(
        _offset_kernel,
        out_shape=jax.ShapeDtypeStruct((1, 128), jnp.float32),
        in_specs=[
            pl.BlockSpec(memory_space=pltpu.MemorySpace.SMEM),   # index
            pl.BlockSpec(memory_space=pltpu.MemorySpace.VMEM),   # padded table
        ],
        out_specs=pl.BlockSpec(memory_space=pltpu.MemorySpace.VMEM),
    )(idx, table_pad)
    return out[:, :dim]


# ----------------------------------------------------------------------------
# Module-equivalent Python wrapper
# ----------------------------------------------------------------------------
class PointLightNetwork:
    """JAX/Pallas port of the PyTorch PointLightNetwork."""

    def __init__(self, enable_offset=False):
        # nn.Parameter(torch.tensor(5.0))
        self.light = jnp.asarray(5.0, jnp.float32)
        self.enable_offset = enable_offset
        if enable_offset:
            # nn.Embedding(1, 3) with weight [[0., 0., 0.]]
            self.light_offset_weight = jnp.zeros((1, 3), jnp.float32)

    def forward(self):
        return point_light_forward(self.light)

    __call__ = forward

    @property
    def offset(self):
        # equivalent to self.light_offset(torch.LongTensor([0]))
        return embedding_lookup(self.light_offset_weight,
                                jnp.zeros((1,), jnp.int32))

    def set_light(self, light):
        self.light = jnp.asarray(light, jnp.float32)

    def get_light(self):
        return self.light

    def get_offset(self):
        return self.light_offset_weight


# ----------------------------------------------------------------------------
# Self-test
# ----------------------------------------------------------------------------
if __name__ == "__main__":
    key = jax.random.PRNGKey(0)

    net = PointLightNetwork(enable_offset=True)

    # forward() must return the light parameter (default 5.0).
    out = net()
    jax.block_until_ready(out)
    np.testing.assert_allclose(np.asarray(out), np.float32(5.0), rtol=0, atol=0)

    # set_light with a deterministic value derived from PRNGKey(0), then
    # forward() again.
    new_light = float(jax.random.uniform(key, (), jnp.float32, 0.0, 10.0))
    net.set_light(new_light)
    out2 = net()
    jax.block_until_ready(out2)
    np.testing.assert_allclose(np.asarray(out2), np.float32(new_light),
                               rtol=1e-7, atol=0)

    # offset property: embedding lookup of index 0 -> the (zero) offset row.
    off = net.offset
    jax.block_until_ready(off)
    np.testing.assert_allclose(np.asarray(off), np.zeros((1, 3), np.float32),
                               rtol=0, atol=0)

    assert out.shape == () and out2.shape == () and off.shape == (1, 3)
    # TODO(synk): .data.fill_ / .detach() mutation semantics have no device-side
    # equivalent; set_light/get_light operate on the host-held parameter.
    print("KERNEL_OK")
</pallas_src>

<mosaic_0001>
module attributes {stable_mosaic.version = 11 : i64} {
  func.func @_light_forward_kernel(%arg0: memref<1x1xf32, #tpu.memory_space<smem>>, %arg1: memref<1x1xf32, #tpu.memory_space<smem>>) attributes {dimension_semantics = [], scalar_prefetch = 0 : i64, scratch_operands = 0 : i64, tpu.core_type = #tpu.core_type<tc>} {
    %c0 = arith.constant 0 : index
    %c0_0 = arith.constant 0 : index
    %0 = memref.load %arg0[%c0, %c0_0] : memref<1x1xf32, #tpu.memory_space<smem>>
    %c0_1 = arith.constant 0 : index
    %c0_2 = arith.constant 0 : index
    %1 = memref.load %arg1[%c0_1, %c0_2] : memref<1x1xf32, #tpu.memory_space<smem>>
    memref.store %0, %arg1[%c0_1, %c0_2] : memref<1x1xf32, #tpu.memory_space<smem>>
    return
  }
}

</mosaic_0001>

<llo_original>
// kernel: point_light_forward.1
$region0: #{point_light_forward.1}
  #allocation0 [shape = 'u32[]', space=smem, size = 0x4, offset = 0x4, fixed_abs, tag = 'smem constant byte address 0x4 - core index']
  #allocation1 [shape = 'u32[144,128]{1,0:T(1,128)}', space=vmem, size = 0x12000, scoped, tag = 'internal scratch']
  #allocation2 [shape = 'f32[1,1]{1,0:T(1,128)S(6)}', space=smem, size = 0x200, scoped, tag = 'scoped memory for point_light_forward.1']
  %s0 = inlined_call_operand.<no memory space> [shape: f32[1,1], index: 0, kind: input, shape index: {}]
  %s1 = inlined_call_operand.hbm [shape: f32[1,1], index: 1, kind: output, shape index: {}]
  %s2 = sld [smem:[#allocation0]]
  $region14: #{point_light_forward.1} parent=0
    _
  %s4 = ssub.s32 1, %s2
  %s5 = scalar_select 0, %s4, %s2
  %6 = sst [smem:[#allocation2]] %s0
  $region1: #{point_light_forward.1} parent=0
    #allocation3 [shape = 'u8[512]{0}', space=smem, size = 0x200, scoped, tag = 'output window, operand 0, single buffered']
    #allocation4 [shape = 's32[1]{0}', space=sflag, size = 0x4, scoped, tag = 'scoped memory for point_light_forward.1']
    %7 = vsyncpa [#allocation4], 0
    // Predicated region
    $region2: #{point_light_forward.1} parent=1 // pred_check
      _
    $region3: #{point_light_forward.1} parent=1 // pred_check_branch
      %9 = sbr.rel (0) target = $region5
    $region4: #{point_light_forward.1} parent=1 // pred_region
      _
    $region5: #{point_light_forward.1} parent=1 // pred_fallthru
      _
    %s10 = sld [smem:[#allocation2]]
    %s11 = scalar_lea.smem [#allocation3], 0
    %12 = sst [smem:[%s11]] %s10
    // Predicated region
    $region6: #{point_light_forward.1} parent=1 // pred_check
      _
    $region7: #{point_light_forward.1} parent=1 // pred_check_branch
      %14 = sbr.rel (0) target = $region9
    $region8: #{point_light_forward.1} parent=1 // pred_region
      %s16 = ssub.s32 16, 16
      %17 = vsyncadd [#allocation4], %s16
      %20 = dma.smem_to_hbm [#allocation3], 16, %s1, [#allocation4]
    $region9: #{point_light_forward.1} parent=1 // pred_fallthru
      _
    // Predicated region
    $region10: #{point_light_forward.1} parent=1 // pred_check
      _
    $region11: #{point_light_forward.1} parent=1 // pred_check_branch
      %22 = sbr.rel (0) target = $region13
    $region12: #{point_light_forward.1} parent=1 // pred_region
      %23 = dma.done [#allocation4], 16
    $region13: #{point_light_forward.1} parent=1 // pred_fallthru
      _
    %24 = sfence
    %25 = vsyncpa [#allocation4], 1

</llo_original>
